<compile_context>
chip_gen: v6e
topology: v6e:2x2x1
jax: 0.10.0
libtpu: 0.0.40
codegen_flags: <defaults>
</compile_context>

<pallas_src>
import functools
import math

import jax
import jax.numpy as jnp
import numpy as np
from jax.experimental import pallas as pl
from jax.experimental.pallas import tpu as pltpu


def _round_up(x, m):
    return (x + m - 1) // m * m


def _classifier_kernel(x_ref, w1_ref, b1_ref, w2_ref, b2_ref, w3_ref, b3_ref,
                       o_ref, *, compute_dtype):
    """Fused MLP batch-tile: three matmuls + biases + ReLUs, all in VMEM."""
    x = x_ref[...].astype(compute_dtype)

    # Layer 1: Linear(F -> H) + ReLU (f32 accumulation on the MXU).
    h1 = jnp.dot(x, w1_ref[...], preferred_element_type=jnp.float32) + b1_ref[...]
    h1 = jnp.maximum(h1, 0.0)

    # (Dropout: identity in eval mode.)

    # Layer 2: Linear(H -> 64) + ReLU.
    h2 = jnp.dot(h1.astype(compute_dtype), w2_ref[...],
                 preferred_element_type=jnp.float32) + b2_ref[...]
    h2 = jnp.maximum(h2, 0.0)

    # Layer 3: Linear(64 -> C_pad); lane dim pre-padded to 128 for full-width
    # MXU pass and unmasked stores.
    out = jnp.dot(h2.astype(compute_dtype), w3_ref[...],
                  preferred_element_type=jnp.float32) + b3_ref[...]
    o_ref[...] = out.astype(o_ref.dtype)


def classifier_forward(x, params, *, block_m=8192, compute_dtype=jnp.float32):
    """Fused Pallas MLP.

    x: [B, F] float32. Returns PyTorch-style .squeeze()'d logits.
    block_m: max batch rows per grid step (large default so typical batches are
    a single step). compute_dtype: set jnp.bfloat16 for 2x MXU rate / half the
    weight DMA (accumulation stays f32); default f32 preserves torch numerics.
    """
    w1, b1, w2, b2, w3, b3 = params
    B, F = x.shape
    H = w1.shape[1]
    K2 = w2.shape[1]          # 64
    C = w3.shape[1]

    # --- lane-pad the final layer so the output last dim is a full 128 lanes.
    C_pad = _round_up(C, 128)
    if C_pad != C:
        w3 = jnp.pad(w3, ((0, 0), (0, C_pad - C)))
        b3 = jnp.pad(b3, ((0, 0), (0, C_pad - C)))

    # --- hoist dtype casts out of the kernel (weights only; biases stay f32
    #     since they are added to the f32 accumulator).
    if compute_dtype != jnp.float32:
        w1 = w1.astype(compute_dtype)
        w2 = w2.astype(compute_dtype)
        w3 = w3.astype(compute_dtype)

    x_item = jnp.dtype(x.dtype).itemsize
    out_item = 4  # f32 output
    weight_bytes = sum(int(a.size) * jnp.dtype(a.dtype).itemsize
                       for a in (w1, b1, w2, b2, w3, b3))

    # --- generation-aware VMEM budget (v7x: 64 MiB/TC; v5e/v6e: 128 MiB).
    try:
        vmem_cap = int(pltpu.get_tpu_info().vmem_capacity_bytes)
    except Exception:
        vmem_cap = 64 * 1024 * 1024          # conservative: v7x per-TC
    budget = vmem_cap * 3 // 4
    slack = 4 << 20

    # Double-buffered x/out tiles + double-buffered resident weights.
    per_row = 2 * (F * x_item + C_pad * out_item)
    tm_max = max(8, (budget - 2 * weight_bytes - slack) // per_row // 8 * 8)

    # --- tile / grid selection: fewest possible steps, even step count when >1
    #     so v7x's two TensorCores both get work.  No batch padding of x.
    B8 = _round_up(B, 8)
    tm = max(8, min(_round_up(block_m, 8), B8, tm_max))
    steps = pl.cdiv(B8, tm)
    if steps > 1 and steps % 2 == 1:
        steps += 1
        tm = max(8, _round_up(pl.cdiv(B8, steps), 8))
    grid_steps = pl.cdiv(B, tm)              # partial final block handled by Pallas

    vmem_limit = int(min(budget,
                         2 * tm * (F * x_item + C_pad * out_item)
                         + 2 * weight_bytes + slack))

    cost = pl.CostEstimate(
        flops=2 * B * (F * H + H * K2 + K2 * C_pad),
        transcendentals=0,
        bytes_accessed=int(x.size) * x_item + weight_bytes + B * C_pad * out_item,
    )

    def resident(shape):
        # Full-array block; same block index every grid step -> stays in VMEM.
        return pl.BlockSpec(shape, lambda i: (0, 0))

    out = pl.pallas_call(
        functools.partial(_classifier_kernel, compute_dtype=compute_dtype),
        out_shape=jax.ShapeDtypeStruct((B, C_pad), jnp.float32),
        grid=(grid_steps,),
        in_specs=[
            pl.BlockSpec((tm, F), lambda i: (i, 0)),       # x: batch-tiled
            resident((F, H)), resident((1, H)),            # layer 1 (resident)
            resident((H, K2)), resident((1, K2)),          # layer 2 (resident)
            resident((K2, C_pad)), resident((1, C_pad)),   # layer 3 (resident)
        ],
        out_specs=pl.BlockSpec((tm, C_pad), lambda i: (i, 0)),
        compiler_params=pltpu.CompilerParams(
            dimension_semantics=("parallel",),
            vmem_limit_bytes=vmem_limit,
        ),
        cost_estimate=cost,
    )(x, w1, b1, w2, b2, w3, b3)

    logits = out[:, :C]
    # PyTorch .squeeze(): drop all size-1 dims.
    return jnp.squeeze(logits)


def classifier_reference(x, params):
    """Pure-JAX reference (eval-mode dropout = identity)."""
    w1, b1, w2, b2, w3, b3 = params
    h1 = jnp.maximum(jnp.dot(x, w1, precision="highest") + b1, 0.0)
    h2 = jnp.maximum(jnp.dot(h1, w2, precision="highest") + b2, 0.0)
    out = jnp.dot(h2, w3, precision="highest") + b3
    return jnp.squeeze(out)


def init_params(key, input_size, hidden_size, num_class):
    """Deterministic PyTorch-style nn.Linear init: U(-1/sqrt(fan_in), +1/sqrt(fan_in))."""
    def linear_init(k, fan_in, fan_out):
        kw, kb = jax.random.split(k)
        bound = 1.0 / math.sqrt(fan_in)
        w = jax.random.uniform(kw, (fan_in, fan_out), jnp.float32, -bound, bound)
        b = jax.random.uniform(kb, (1, fan_out), jnp.float32, -bound, bound)
        return w, b

    k1, k2, k3 = jax.random.split(key, 3)
    w1, b1 = linear_init(k1, input_size, hidden_size)
    w2, b2 = linear_init(k2, hidden_size, 64)
    w3, b3 = linear_init(k3, 64, num_class)
    return (w1, b1, w2, b2, w3, b3)


if __name__ == "__main__":
    # Small shapes consistent with the module's __init__.
    graph_output_size = 24
    global_output_size = 8
    input_size = graph_output_size + global_output_size  # 32
    hidden_size = 32
    num_class = 4
    batch = 8

    key = jax.random.PRNGKey(0)
    kx, kp = jax.random.split(key)

    x = jax.random.normal(kx, (batch, input_size), dtype=jnp.float32)
    params = init_params(kp, input_size, hidden_size, num_class)

    # 1) Demo shapes (B=8): single grid step (default large block_m).
    logits = classifier_forward(x, params)
    jax.block_until_ready(logits)
    assert logits.shape == (batch, num_class), logits.shape
    np.testing.assert_allclose(np.asarray(logits),
                               np.asarray(classifier_reference(x, params)),
                               rtol=2e-2, atol=2e-2)

    # 2) Exercise the multi-step batch grid with an even step count and a
    #    partial final block (B=80, tile cap 32 -> 4 steps of 24 rows).
    x_big = jax.random.normal(jax.random.PRNGKey(1), (80, input_size), jnp.float32)
    logits_big = classifier_forward(x_big, params, block_m=32)
    jax.block_until_ready(logits_big)
    assert logits_big.shape == (80, num_class), logits_big.shape
    np.testing.assert_allclose(np.asarray(logits_big),
                               np.asarray(classifier_reference(x_big, params)),
                               rtol=2e-2, atol=2e-2)

    print("KERNEL_OK")
</pallas_src>

<mosaic_0001>
module attributes {stable_mosaic.version = 11 : i64} {
  func.func @_classifier_kernel(%arg0: i32, %arg1: memref<8x32xf32, #tpu.memory_space<vmem>>, %arg2: memref<32x32xf32, #tpu.memory_space<vmem>>, %arg3: memref<1x32xf32, #tpu.memory_space<vmem>>, %arg4: memref<32x64xf32, #tpu.memory_space<vmem>>, %arg5: memref<1x64xf32, #tpu.memory_space<vmem>>, %arg6: memref<64x128xf32, #tpu.memory_space<vmem>>, %arg7: memref<1x128xf32, #tpu.memory_space<vmem>>, %arg8: memref<8x128xf32, #tpu.memory_space<vmem>>) attributes {dimension_semantics = [#tpu.dimension_semantics<parallel>], iteration_bounds = array<i64: 1>, scalar_prefetch = 0 : i64, scratch_operands = 0 : i64, tpu.core_type = #tpu.core_type<tc>, window_params = [{transform_indices = @transform_0, window_bounds = array<i64: 8, 32>}, {pipeline_mode = #tpu.pipeline_mode<synchronous>, transform_indices = @transform_1, window_bounds = array<i64: 32, 32>}, {pipeline_mode = #tpu.pipeline_mode<synchronous>, transform_indices = @transform_2, window_bounds = array<i64: 1, 32>}, {pipeline_mode = #tpu.pipeline_mode<synchronous>, transform_indices = @transform_3, window_bounds = array<i64: 32, 64>}, {pipeline_mode = #tpu.pipeline_mode<synchronous>, transform_indices = @transform_4, window_bounds = array<i64: 1, 64>}, {pipeline_mode = #tpu.pipeline_mode<synchronous>, transform_indices = @transform_5, window_bounds = array<i64: 64, 128>}, {pipeline_mode = #tpu.pipeline_mode<synchronous>, transform_indices = @transform_6, window_bounds = array<i64: 1, 128>}, {transform_indices = @transform_7, window_bounds = array<i64: 8, 128>}]} {
    %c0 = arith.constant 0 : index
    %c0_0 = arith.constant 0 : index
    %0 = vector.load %arg1[%c0, %c0_0] : memref<8x32xf32, #tpu.memory_space<vmem>>, vector<8x32xf32>
    %c0_1 = arith.constant 0 : index
    %c0_2 = arith.constant 0 : index
    %1 = vector.load %arg2[%c0_1, %c0_2] : memref<32x32xf32, #tpu.memory_space<vmem>>, vector<32x32xf32>
    %cst = arith.constant dense<0.000000e+00> : vector<8x32xf32>
    %2 = tpu.matmul %0, %1, %cst {dimension_numbers = #tpu.dot_dimension_numbers<[1], [0], [0], [1], [0, 0, 1, 1], [], []>} : vector<8x32xf32>, vector<32x32xf32>, vector<8x32xf32> -> vector<8x32xf32>
    %c0_3 = arith.constant 0 : index
    %c0_4 = arith.constant 0 : index
    %3 = vector.load %arg3[%c0_3, %c0_4] : memref<1x32xf32, #tpu.memory_space<vmem>>, vector<1x32xf32>
    %4 = vector.broadcast %3 : vector<1x32xf32> to vector<8x32xf32>
    %5 = arith.addf %2, %4 : vector<8x32xf32>
    %cst_5 = arith.constant 0.000000e+00 : f32
    %6 = vector.broadcast %cst_5 : f32 to vector<8x32xf32>
    %7 = arith.maximumf %5, %6 : vector<8x32xf32>
    %c0_6 = arith.constant 0 : index
    %c0_7 = arith.constant 0 : index
    %8 = vector.load %arg4[%c0_6, %c0_7] : memref<32x64xf32, #tpu.memory_space<vmem>>, vector<32x64xf32>
    %cst_8 = arith.constant dense<0.000000e+00> : vector<8x64xf32>
    %9 = tpu.matmul %7, %8, %cst_8 {dimension_numbers = #tpu.dot_dimension_numbers<[1], [0], [0], [1], [0, 0, 1, 1], [], []>} : vector<8x32xf32>, vector<32x64xf32>, vector<8x64xf32> -> vector<8x64xf32>
    %c0_9 = arith.constant 0 : index
    %c0_10 = arith.constant 0 : index
    %10 = vector.load %arg5[%c0_9, %c0_10] : memref<1x64xf32, #tpu.memory_space<vmem>>, vector<1x64xf32>
    %11 = vector.broadcast %10 : vector<1x64xf32> to vector<8x64xf32>
    %12 = arith.addf %9, %11 : vector<8x64xf32>
    %cst_11 = arith.constant 0.000000e+00 : f32
    %13 = vector.broadcast %cst_11 : f32 to vector<8x64xf32>
    %14 = arith.maximumf %12, %13 : vector<8x64xf32>
    %c0_12 = arith.constant 0 : index
    %c0_13 = arith.constant 0 : index
    %15 = vector.load %arg6[%c0_12, %c0_13] : memref<64x128xf32, #tpu.memory_space<vmem>>, vector<64x128xf32>
    %cst_14 = arith.constant dense<0.000000e+00> : vector<8x128xf32>
    %16 = tpu.matmul %14, %15, %cst_14 {dimension_numbers = #tpu.dot_dimension_numbers<[1], [0], [0], [1], [0, 0, 1, 1], [], []>} : vector<8x64xf32>, vector<64x128xf32>, vector<8x128xf32> -> vector<8x128xf32>
    %c0_15 = arith.constant 0 : index
    %c0_16 = arith.constant 0 : index
    %17 = vector.load %arg7[%c0_15, %c0_16] : memref<1x128xf32, #tpu.memory_space<vmem>>, vector<1x128xf32>
    %18 = vector.broadcast %17 : vector<1x128xf32> to vector<8x128xf32>
    %19 = arith.addf %16, %18 : vector<8x128xf32>
    %c0_17 = arith.constant 0 : index
    %c0_18 = arith.constant 0 : index
    %20 = vector.load %arg8[%c0_17, %c0_18] : memref<8x128xf32, #tpu.memory_space<vmem>>, vector<8x128xf32>
    tpu.vector_store %arg8[%c0_17, %c0_18], %19 {strides = array<i32>} : memref<8x128xf32, #tpu.memory_space<vmem>>, vector<8x128xf32>,
    return
  }
  func.func @transform_0(%arg0: i32) -> (i32, i32) {
    %c0_i32 = arith.constant 0 : i32
    %c0_i32_0 = arith.constant 0 : i32
    return %arg0, %c0_i32 : i32, i32
  }
  func.func @transform_1(%arg0: i32) -> (i32, i32) {
    %c0_i32 = arith.constant 0 : i32
    %c0_i32_0 = arith.constant 0 : i32
    %c0_i32_1 = arith.constant 0 : i32
    return %c0_i32, %c0_i32_0 : i32, i32
  }
  func.func @transform_2(%arg0: i32) -> (i32, i32) {
    %c0_i32 = arith.constant 0 : i32
    %c0_i32_0 = arith.constant 0 : i32
    %c0_i32_1 = arith.constant 0 : i32
    return %c0_i32, %c0_i32_0 : i32, i32
  }
  func.func @transform_3(%arg0: i32) -> (i32, i32) {
    %c0_i32 = arith.constant 0 : i32
    %c0_i32_0 = arith.constant 0 : i32
    %c0_i32_1 = arith.constant 0 : i32
    return %c0_i32, %c0_i32_0 : i32, i32
  }
  func.func @transform_4(%arg0: i32) -> (i32, i32) {
    %c0_i32 = arith.constant 0 : i32
    %c0_i32_0 = arith.constant 0 : i32
    %c0_i32_1 = arith.constant 0 : i32
    return %c0_i32, %c0_i32_0 : i32, i32
  }
  func.func @transform_5(%arg0: i32) -> (i32, i32) {
    %c0_i32 = arith.constant 0 : i32
    %c0_i32_0 = arith.constant 0 : i32
    %c0_i32_1 = arith.constant 0 : i32
    return %c0_i32, %c0_i32_0 : i32, i32
  }
  func.func @transform_6(%arg0: i32) -> (i32, i32) {
    %c0_i32 = arith.constant 0 : i32
    %c0_i32_0 = arith.constant 0 : i32
    %c0_i32_1 = arith.constant 0 : i32
    return %c0_i32, %c0_i32_0 : i32, i32
  }
  func.func @transform_7(%arg0: i32) -> (i32, i32) {
    %c0_i32 = arith.constant 0 : i32
    %c0_i32_0 = arith.constant 0 : i32
    return %arg0, %c0_i32 : i32, i32
  }
}

</mosaic_0001>

<llo_original>
// kernel: tpu_custom_call.1
$region0: #{tpu_custom_call.1}
  #allocation0 [shape = 'u32[]', space=smem, size = 0x4, offset = 0x4, fixed_abs, tag = 'smem constant byte address 0x4 - core index']
  #allocation1 [shape = 'u32[144,128]{1,0:T(1,128)}', space=vmem, size = 0x12000, scoped, tag = 'internal scratch']
  %s0 = inlined_call_operand.hbm [shape: f32[8,32], index: 0, kind: input, shape index: {}]
  %s1 = inlined_call_operand.hbm [shape: f32[32,32], index: 1, kind: input, shape index: {}]
  %s2 = inlined_call_operand.vmem [shape: f32[1,32], index: 2, kind: input, shape index: {}]
  %s3 = inlined_call_operand.hbm [shape: f32[32,64], index: 3, kind: input, shape index: {}]
  %s4 = inlined_call_operand.vmem [shape: f32[1,64], index: 4, kind: input, shape index: {}]
  %s5 = inlined_call_operand.hbm [shape: f32[64,128], index: 5, kind: input, shape index: {}]
  %s6 = inlined_call_operand.vmem [shape: f32[1,128], index: 6, kind: input, shape index: {}]
  %s7 = inlined_call_operand.hbm [shape: f32[8,128], index: 7, kind: output, shape index: {}]
  %s8 = sld [smem:[#allocation0]]
  $region54: #{tpu_custom_call.1} parent=0
    _
  %s10 = ssub.s32 1, %s8
  %s11 = scalar_select 0, %s10, %s8
  $region1: #{tpu_custom_call.1} parent=0
    #allocation2 [shape = 'u8[4096]{0}', space=vmem, size = 0x1000, scoped, tag = 'input window, operand 0, single buffered']
    #allocation3 [shape = 's32[1]{0}', space=sflag, size = 0x4, scoped, tag = 'scoped memory for tpu_custom_call.1']
    #allocation4 [shape = 's32[1]{0}', space=sflag, size = 0x4, scoped, tag = 'scoped memory for tpu_custom_call.1']
    #allocation5 [shape = 'u8[16384]{0}', space=vmem, size = 0x4000, scoped, tag = 'input window, operand 1, single buffered']
    #allocation6 [shape = 's32[1]{0}', space=sflag, size = 0x4, scoped, tag = 'scoped memory for tpu_custom_call.1']
    #allocation7 [shape = 'u8[16384]{0}', space=vmem, size = 0x4000, scoped, tag = 'input window, operand 3, single buffered']
    #allocation8 [shape = 'u8[32768]{0}', space=vmem, size = 0x8000, scoped, tag = 'input window, operand 5, single buffered']
    #allocation9 [shape = 's32[1]{0}', space=sflag, size = 0x4, scoped, tag = 'scoped memory for tpu_custom_call.1']
    #allocation10 [shape = 'u8[4096]{0}', space=vmem, size = 0x1000, scoped, tag = 'output window, operand 0, single buffered']
    %12 = vsyncpa [#allocation3], 0
    %13 = vsyncpa [#allocation6], 0
    %14 = vsyncpa [#allocation9], 0
    %15 = vsyncpa [#allocation4], 0
    // Predicated region
    $region2: #{tpu_custom_call.1} parent=1 // pred_check
      _
    $region3: #{tpu_custom_call.1} parent=1 // pred_check_branch
      %17 = sbr.rel (0) target = $region5
    $region4: #{tpu_custom_call.1} parent=1 // pred_region
      %s19 = ssub.s32 128, 128
      %20 = vsyncadd [#allocation3], %s19
      %s22 = sshll.u32 [#allocation2], 4
      %s23 = int_to_ptr.vmem [resolvable:$true] %s22
      %25 = dma.hbm_to_vmem [thread:$0]  %s0, 128, %s23, [#allocation3]
    $region5: #{tpu_custom_call.1} parent=1 // pred_fallthru
      _
    // Predicated region
    $region6: #{tpu_custom_call.1} parent=1 // pred_check
      _
    $region7: #{tpu_custom_call.1} parent=1 // pred_check_branch
      %27 = sbr.rel (0) target = $region9
    $region8: #{tpu_custom_call.1} parent=1 // pred_region
      %s29 = ssub.s32 512, 512
      %30 = vsyncadd [#allocation6], %s29
      %s31 = sshll.u32 [#allocation5], 4
      %s32 = int_to_ptr.vmem [resolvable:$true] %s31
      %37 = dma.hbm_to_vmem [thread:$0]  %s1, 512, %s32, [#allocation6], 128, 128, 8
    $region9: #{tpu_custom_call.1} parent=1 // pred_fallthru
      _
    // Predicated region
    $region10: #{tpu_custom_call.1} parent=1 // pred_check
      _
    $region11: #{tpu_custom_call.1} parent=1 // pred_check_branch
      %39 = sbr.rel (0) target = $region13
    $region12: #{tpu_custom_call.1} parent=1 // pred_region
      _
    $region13: #{tpu_custom_call.1} parent=1 // pred_fallthru
      _
    // Predicated region
    $region14: #{tpu_custom_call.1} parent=1 // pred_check
      _
    $region15: #{tpu_custom_call.1} parent=1 // pred_check_branch
      %41 = sbr.rel (0) target = $region17
    $region16: #{tpu_custom_call.1} parent=1 // pred_region
      %s43 = ssub.s32 512, 512
      %44 = vsyncadd [#allocation6], %s43
      %s45 = sshll.u32 [#allocation7], 4
      %s46 = int_to_ptr.vmem [resolvable:$true] %s45
      %51 = dma.hbm_to_vmem [thread:$0]  %s3, 512, %s46, [#allocation6], 128, 128, 8
    $region17: #{tpu_custom_call.1} parent=1 // pred_fallthru
      _
    // Predicated region
    $region18: #{tpu_custom_call.1} parent=1 // pred_check
      _
    $region19: #{tpu_custom_call.1} parent=1 // pred_check_branch
      %53 = sbr.rel (0) target = $region21
    $region20: #{tpu_custom_call.1} parent=1 // pred_region
      _
    $region21: #{tpu_custom_call.1} parent=1 // pred_fallthru
      _
    // Predicated region
    $region22: #{tpu_custom_call.1} parent=1 // pred_check
      _
    $region23: #{tpu_custom_call.1} parent=1 // pred_check_branch
      %55 = sbr.rel (0) target = $region25
    $region24: #{tpu_custom_call.1} parent=1 // pred_region
      %s57 = ssub.s32 1024, 1024
      %58 = vsyncadd [#allocation9], %s57
      %s59 = sshll.u32 [#allocation8], 4
      %s60 = int_to_ptr.vmem [resolvable:$true] %s59
      %65 = dma.hbm_to_vmem [thread:$0]  %s5, 1024, %s60, [#allocation9], 128, 128, 8
    $region25: #{tpu_custom_call.1} parent=1 // pred_fallthru
      _
    // Predicated region
    $region26: #{tpu_custom_call.1} parent=1 // pred_check
      _
    $region27: #{tpu_custom_call.1} parent=1 // pred_check_branch
      %67 = sbr.rel (0) target = $region29
    $region28: #{tpu_custom_call.1} parent=1 // pred_region
      _
    $region29: #{tpu_custom_call.1} parent=1 // pred_fallthru
      _
    // Predicated region
    $region30: #{tpu_custom_call.1} parent=1 // pred_check
      _
    $region31: #{tpu_custom_call.1} parent=1 // pred_check_branch
      %69 = sbr.rel (0) target = $region33
    $region32: #{tpu_custom_call.1} parent=1 // pred_region
      %70 = dma.done [#allocation3], 128
    $region33: #{tpu_custom_call.1} parent=1 // pred_fallthru
      _
    // Predicated region
    $region34: #{tpu_custom_call.1} parent=1 // pred_check
      _
    $region35: #{tpu_custom_call.1} parent=1 // pred_check_branch
      %72 = sbr.rel (0) target = $region37
    $region36: #{tpu_custom_call.1} parent=1 // pred_region
      %73 = dma.done [#allocation6], 512
    $region37: #{tpu_custom_call.1} parent=1 // pred_fallthru
      _
    // Predicated region
    $region38: #{tpu_custom_call.1} parent=1 // pred_check
      _
    $region39: #{tpu_custom_call.1} parent=1 // pred_check_branch
      %75 = sbr.rel (0) target = $region41
    $region40: #{tpu_custom_call.1} parent=1 // pred_region
      %76 = dma.done [#allocation6], 512
    $region41: #{tpu_custom_call.1} parent=1 // pred_fallthru
      _
    // Predicated region
    $region42: #{tpu_custom_call.1} parent=1 // pred_check
      _
    $region43: #{tpu_custom_call.1} parent=1 // pred_check_branch
      %78 = sbr.rel (0) target = $region45
    $region44: #{tpu_custom_call.1} parent=1 // pred_region
      %79 = dma.done [#allocation9], 1024
    $region45: #{tpu_custom_call.1} parent=1 // pred_fallthru
      _
    %v80 = vld [vmem:[#allocation2] sm:$0xff]
    %v81 = vld [vmem:[#allocation5] sm:$0xff]
    %v82 = vld [vmem:[#allocation5 + $0x8] sm:$0xff]
    %v83 = vld [vmem:[#allocation5 + $0x10] sm:$0xff]
    %v84 = vld [vmem:[#allocation5 + $0x18] sm:$0xff]
    %v85 = vld [vmem:[%s2] sm:$0x1]
    %v87 = vlaneseq
    %v88 = vshrl.u32 %v87, 7
    %v89 = vsub.s32 0, %v88
    %v90 = vrot.slane %v85, %v89
    %vm92 = vcmask 261120
    %v94 = vsel %vm92, %v80, 0
    %96 = vmatprep.subr.mxu0 0.0
    %97 = vmatpush1.msra.mxu0 0.0
    %98 = vmatprep.subr.mxu0 0.0
    %99 = vmatpush1.msra.mxu0 0.0
    %100 = vmatprep.subr.mxu0 0.0
    %101 = vmatpush1.msra.mxu0 0.0
    %102 = vmatprep.subr.mxu0 0.0
    %103 = vmatpush1.msra.mxu0 0.0
    %104 = vmatprep.subr.mxu0 0.0
    %105 = vmatpush1.msra.mxu0 0.0
    %106 = vmatprep.subr.mxu0 0.0
    %107 = vmatpush1.msra.mxu0 0.0
    %108 = vmatprep.subr.mxu0 0.0
    %109 = vmatpush1.msra.mxu0 0.0
    %110 = vmatprep.subr.mxu0 0.0
    %111 = vmatpush1.msra.mxu0 0.0
    %112 = vmatprep.subr.mxu0 0.0
    %113 = vmatpush1.msra.mxu0 0.0
    %114 = vmatprep.subr.mxu0 0.0
    %115 = vmatpush1.msra.mxu0 0.0
    %116 = vmatprep.subr.mxu0 0.0
    %117 = vmatpush1.msra.mxu0 0.0
    %118 = vmatprep.subr.mxu0 0.0
    %119 = vmatpush1.msra.mxu0 0.0
    %120 = vmatprep.subr.mxu0 0.0
    %121 = vmatpush1.msra.mxu0 %v84
    %122 = vmatprep.subr.mxu0 0.0
    %123 = vmatpush1.msra.mxu0 %v83
    %124 = vmatprep.subr.mxu0 0.0
    %125 = vmatpush1.msra.mxu0 %v82
    %126 = vmatprep.subr.mxu0 0.0
    %127 = vmatpush1.msra.mxu0 %v81
    %128 = vmatprep.subr.mxu0 0.0
    %129 = vmatpush2.msra.mxu0 0.0
    %130 = vmatprep.subr.mxu0 0.0
    %131 = vmatpush2.msra.mxu0 0.0
    %132 = vmatprep.subr.mxu0 0.0
    %133 = vmatpush2.msra.mxu0 0.0
    %134 = vmatprep.subr.mxu0 0.0
    %135 = vmatpush2.msra.mxu0 0.0
    %136 = vmatprep.subr.mxu0 0.0
    %137 = vmatpush2.msra.mxu0 0.0
    %138 = vmatprep.subr.mxu0 0.0
    %139 = vmatpush2.msra.mxu0 0.0
    %140 = vmatprep.subr.mxu0 0.0
    %141 = vmatpush2.msra.mxu0 0.0
    %142 = vmatprep.subr.mxu0 0.0
    %143 = vmatpush2.msra.mxu0 0.0
    %144 = vmatprep.subr.mxu0 0.0
    %145 = vmatpush2.msra.mxu0 0.0
    %146 = vmatprep.subr.mxu0 0.0
    %147 = vmatpush2.msra.mxu0 0.0
    %148 = vmatprep.subr.mxu0 0.0
    %149 = vmatpush2.msra.mxu0 0.0
    %150 = vmatprep.subr.mxu0 0.0
    %151 = vmatpush2.msra.mxu0 0.0
    %152 = vmatprep.subr.mxu0 0.0
    %153 = vmatpush2.msra.mxu0 0.0
    %154 = vmatprep.subr.mxu0 0.0
    %155 = vmatpush2.msra.mxu0 0.0
    %156 = vmatprep.subr.mxu0 0.0
    %157 = vmatpush2.msra.mxu0 0.0
    %158 = vmatprep.subr.mxu0 0.0
    %159 = vmatpush2.msra.mxu0 0.0
    %160 = vmatprep.mubr.f32.mxu0 0.0
    %161 = vmatmul.mubr.f32.gmra.mxu0 %v94
    %v162 = vpop.f32.mrf.mxu0
    %v163 = vadd.f32 %v90, %v162
    %v164 = vpop.f32.mrf.mxu0
    %165 = vdwg.mxu0
    %v166 = vmax.f32 %v163, 0.0
    %v167 = vld [vmem:[#allocation7] sm:$0xff]
    %v168 = vld [vmem:[#allocation7 + $0x8] sm:$0xff]
    %v169 = vld [vmem:[#allocation7 + $0x10] sm:$0xff]
    %v170 = vld [vmem:[#allocation7 + $0x18] sm:$0xff]
    %v171 = vld [vmem:[%s4] sm:$0x1]
    %v173 = vlaneseq
    %v174 = vshrl.u32 %v173, 7
    %v175 = vsub.s32 0, %v174
    %v176 = vrot.slane %v171, %v175
    %v179 = vsel %vm92, %v166, 0
    %181 = vmatprep.subr.mxu0 0.0
    %182 = vmatpush1.msra.mxu0 0.0
    %183 = vmatprep.subr.mxu0 0.0
    %184 = vmatpush1.msra.mxu0 0.0
    %185 = vmatprep.subr.mxu0 0.0
    %186 = vmatpush1.msra.mxu0 0.0
    %187 = vmatprep.subr.mxu0 0.0
    %188 = vmatpush1.msra.mxu0 0.0
    %189 = vmatprep.subr.mxu0 0.0
    %190 = vmatpush1.msra.mxu0 0.0
    %191 = vmatprep.subr.mxu0 0.0
    %192 = vmatpush1.msra.mxu0 0.0
    %193 = vmatprep.subr.mxu0 0.0
    %194 = vmatpush1.msra.mxu0 0.0
    %195 = vmatprep.subr.mxu0 0.0
    %196 = vmatpush1.msra.mxu0 0.0
    %197 = vmatprep.subr.mxu0 0.0
    %198 = vmatpush1.msra.mxu0 0.0
    %199 = vmatprep.subr.mxu0 0.0
    %200 = vmatpush1.msra.mxu0 0.0
    %201 = vmatprep.subr.mxu0 0.0
    %202 = vmatpush1.msra.mxu0 0.0
    %203 = vmatprep.subr.mxu0 0.0
    %204 = vmatpush1.msra.mxu0 0.0
    %205 = vmatprep.subr.mxu0 0.0
    %206 = vmatpush1.msra.mxu0 %v170
    %207 = vmatprep.subr.mxu0 0.0
    %208 = vmatpush1.msra.mxu0 %v169
    %209 = vmatprep.subr.mxu0 0.0
    %210 = vmatpush1.msra.mxu0 %v168
    %211 = vmatprep.subr.mxu0 0.0
    %212 = vmatpush1.msra.mxu0 %v167
    %213 = vmatprep.subr.mxu0 0.0
    %214 = vmatpush2.msra.mxu0 0.0
    %215 = vmatprep.subr.mxu0 0.0
    %216 = vmatpush2.msra.mxu0 0.0
    %217 = vmatprep.subr.mxu0 0.0
    %218 = vmatpush2.msra.mxu0 0.0
    %219 = vmatprep.subr.mxu0 0.0
    %220 = vmatpush2.msra.mxu0 0.0
    %221 = vmatprep.subr.mxu0 0.0
    %222 = vmatpush2.msra.mxu0 0.0
    %223 = vmatprep.subr.mxu0 0.0
    %224 = vmatpush2.msra.mxu0 0.0
    %225 = vmatprep.subr.mxu0 0.0
    %226 = vmatpush2.msra.mxu0 0.0
    %227 = vmatprep.subr.mxu0 0.0
    %228 = vmatpush2.msra.mxu0 0.0
    %229 = vmatprep.subr.mxu0 0.0
    %230 = vmatpush2.msra.mxu0 0.0
    %231 = vmatprep.subr.mxu0 0.0
    %232 = vmatpush2.msra.mxu0 0.0
    %233 = vmatprep.subr.mxu0 0.0
    %234 = vmatpush2.msra.mxu0 0.0
    %235 = vmatprep.subr.mxu0 0.0
    %236 = vmatpush2.msra.mxu0 0.0
    %237 = vmatprep.subr.mxu0 0.0
    %238 = vmatpush2.msra.mxu0 0.0
    %239 = vmatprep.subr.mxu0 0.0
    %240 = vmatpush2.msra.mxu0 0.0
    %241 = vmatprep.subr.mxu0 0.0
    %242 = vmatpush2.msra.mxu0 0.0
    %243 = vmatprep.subr.mxu0 0.0
    %244 = vmatpush2.msra.mxu0 0.0
    %245 = vmatprep.mubr.f32.mxu0 0.0
    %246 = vmatmul.mubr.f32.gmra.mxu0 %v179
    %v247 = vpop.f32.mrf.mxu0
    %v248 = vadd.f32 %v176, %v247
    %v249 = vpop.f32.mrf.mxu0
    %250 = vdwg.mxu0
    %v251 = vmax.f32 %v248, 0.0
    %v252 = vld [vmem:[#allocation8] sm:$0xff]
    %v253 = vld [vmem:[#allocation8 + $0x8] sm:$0xff]
    %v254 = vld [vmem:[#allocation8 + $0x10] sm:$0xff]
    %v255 = vld [vmem:[#allocation8 + $0x18] sm:$0xff]
    %v256 = vld [vmem:[#allocation8 + $0x20] sm:$0xff]
    %v257 = vld [vmem:[#allocation8 + $0x28] sm:$0xff]
    %v258 = vld [vmem:[#allocation8 + $0x30] sm:$0xff]
    %v259 = vld [vmem:[#allocation8 + $0x38] sm:$0xff]
    %v260 = vld [vmem:[%s6] sm:$0x1]
    %v262 = vlaneseq
    %v263 = vshrl.u32 %v262, 7
    %v264 = vsub.s32 0, %v263
    %v265 = vrot.slane %v260, %v264
    %vm267 = vcmask 523264
    %v269 = vsel %vm267, %v251, 0
    %271 = vmatprep.subr.mxu0 0.0
    %272 = vmatpush1.msra.mxu0 0.0
    %273 = vmatprep.subr.mxu0 0.0
    %274 = vmatpush1.msra.mxu0 0.0
    %275 = vmatprep.subr.mxu0 0.0
    %276 = vmatpush1.msra.mxu0 0.0
    %277 = vmatprep.subr.mxu0 0.0
    %278 = vmatpush1.msra.mxu0 0.0
    %279 = vmatprep.subr.mxu0 0.0
    %280 = vmatpush1.msra.mxu0 0.0
    %281 = vmatprep.subr.mxu0 0.0
    %282 = vmatpush1.msra.mxu0 0.0
    %283 = vmatprep.subr.mxu0 0.0
    %284 = vmatpush1.msra.mxu0 0.0
    %285 = vmatprep.subr.mxu0 0.0
    %286 = vmatpush1.msra.mxu0 0.0
    %287 = vmatprep.subr.mxu0 0.0
    %288 = vmatpush1.msra.mxu0 %v259
    %289 = vmatprep.subr.mxu0 0.0
    %290 = vmatpush1.msra.mxu0 %v258
    %291 = vmatprep.subr.mxu0 0.0
    %292 = vmatpush1.msra.mxu0 %v257
    %293 = vmatprep.subr.mxu0 0.0
    %294 = vmatpush1.msra.mxu0 %v256
    %295 = vmatprep.subr.mxu0 0.0
    %296 = vmatpush1.msra.mxu0 %v255
    %297 = vmatprep.subr.mxu0 0.0
    %298 = vmatpush1.msra.mxu0 %v254
    %299 = vmatprep.subr.mxu0 0.0
    %300 = vmatpush1.msra.mxu0 %v253
    %301 = vmatprep.subr.mxu0 0.0
    %302 = vmatpush1.msra.mxu0 %v252
    %303 = vmatprep.subr.mxu0 0.0
    %304 = vmatpush2.msra.mxu0 0.0
    %305 = vmatprep.subr.mxu0 0.0
    %306 = vmatpush2.msra.mxu0 0.0
    %307 = vmatprep.subr.mxu0 0.0
    %308 = vmatpush2.msra.mxu0 0.0
    %309 = vmatprep.subr.mxu0 0.0
    %310 = vmatpush2.msra.mxu0 0.0
    %311 = vmatprep.subr.mxu0 0.0
    %312 = vmatpush2.msra.mxu0 0.0
    %313 = vmatprep.subr.mxu0 0.0
    %314 = vmatpush2.msra.mxu0 0.0
    %315 = vmatprep.subr.mxu0 0.0
    %316 = vmatpush2.msra.mxu0 0.0
    %317 = vmatprep.subr.mxu0 0.0
    %318 = vmatpush2.msra.mxu0 0.0
    %319 = vmatprep.subr.mxu0 0.0
    %320 = vmatpush2.msra.mxu0 0.0
    %321 = vmatprep.subr.mxu0 0.0
    %322 = vmatpush2.msra.mxu0 0.0
    %323 = vmatprep.subr.mxu0 0.0
    %324 = vmatpush2.msra.mxu0 0.0
    %325 = vmatprep.subr.mxu0 0.0
    %326 = vmatpush2.msra.mxu0 0.0
    %327 = vmatprep.subr.mxu0 0.0
    %328 = vmatpush2.msra.mxu0 0.0
    %329 = vmatprep.subr.mxu0 0.0
    %330 = vmatpush2.msra.mxu0 0.0
    %331 = vmatprep.subr.mxu0 0.0
    %332 = vmatpush2.msra.mxu0 0.0
    %333 = vmatprep.subr.mxu0 0.0
    %334 = vmatpush2.msra.mxu0 0.0
    %335 = vmatprep.mubr.f32.mxu0 0.0
    %336 = vmatmul.mubr.f32.gmra.mxu0 %v269
    %v337 = vpop.f32.mrf.mxu0
    %v338 = vadd.f32 %v265, %v337
    %v339 = vpop.f32.mrf.mxu0
    %340 = vdwg.mxu0
    %341 = vst [vmem:[#allocation10] sm:$0xff] %v338
    // Predicated region
    $region46: #{tpu_custom_call.1} parent=1 // pred_check
      _
    $region47: #{tpu_custom_call.1} parent=1 // pred_check_branch
      %343 = sbr.rel (0) target = $region49
    $region48: #{tpu_custom_call.1} parent=1 // pred_region
      %s345 = ssub.s32 128, 128
      %346 = vsyncadd [#allocation4], %s345
      %s348 = sshll.u32 [#allocation10], 4
      %s349 = int_to_ptr.vmem [resolvable:$true] %s348
      %351 = dma.vmem_to_hbm [thread:$0]  %s349, 128, %s7, [#allocation4]
    $region49: #{tpu_custom_call.1} parent=1 // pred_fallthru
      _
    // Predicated region
    $region50: #{tpu_custom_call.1} parent=1 // pred_check
      _
    $region51: #{tpu_custom_call.1} parent=1 // pred_check_branch
      %353 = sbr.rel (0) target = $region53
    $region52: #{tpu_custom_call.1} parent=1 // pred_region
      %354 = dma.done [#allocation4], 128
    $region53: #{tpu_custom_call.1} parent=1 // pred_fallthru
      _
    %355 = vsyncpa [#allocation3], 1
    %356 = vsyncpa [#allocation6], 1
    %357 = vsyncpa [#allocation9], 1
    %358 = vsyncpa [#allocation4], 1

</llo_original>
